<compile_context>
chip_gen: v5e
topology: v5e:2x2
jax: 0.10.0
libtpu: 0.0.40
codegen_flags: <defaults>
</compile_context>

<pallas_src>
import functools
import math

import jax
import jax.numpy as jnp
from jax.experimental import pallas as pl
from jax.experimental.pallas import tpu as pltpu

_LANE = 128                   # vreg lane width: keep last dim a multiple of 128
_MAX_TILE_ROWS = 2048         # 2048 x 128 x 4B = 1 MiB f32 blocks
_FUSED_F32_BYTES = 8 << 20    # fused single-call path if f32-equivalent slab <= 8 MiB


def _sublane(dtype):
    """Packed sublane count: 8 for 4-byte, 16 for 2-byte, 32 for 1-byte dtypes."""
    return max(8, 32 // jnp.dtype(dtype).itemsize)


def _pick_tile_rows(rows, sublane, max_tile_rows):
    """Largest t <= max_tile_rows with t % sublane == 0 and rows % t == 0."""
    for t in range(min(rows, max_tile_rows), sublane - 1, -1):
        if rows % t == 0 and t % sublane == 0:
            return t
    return None


# ---------------------------------------------------------------------------
# Kernels
# ---------------------------------------------------------------------------
def _fused_kernel(x_ref, o_ref, *, inv_n):
    """Whole-array-in-VMEM path: sum -> mean -> subtract in one kernel."""
    x = x_ref[...].astype(jnp.float32)
    mean = jnp.sum(x) * inv_n
    o_ref[...] = (x - mean).astype(o_ref.dtype)


def _sum_kernel(x_ref, partial_ref):
    """Pass 1: accumulate per-sublane/lane partial sums into a resident
    (1, 8, 128) block (one block per 'parallel' split -> per TensorCore)."""
    @pl.when(pl.program_id(1) == 0)
    def _():
        partial_ref[...] = jnp.zeros_like(partial_ref)
    tile = x_ref[...].astype(jnp.float32)
    r, c = tile.shape
    # (tile_rows, 128) -> (tile_rows//8, 8, 128), VPU adds over leading axis.
    partial_ref[...] += jnp.sum(tile.reshape(r // 8, 8, c), axis=0)[None]


def _center_kernel(partial_ref, x_ref, o_ref, *, inv_n):
    """Pass 2: finish the reduction (tiny, XLU) and subtract the mean (VPU)."""
    mean = jnp.sum(partial_ref[...]) * inv_n
    o_ref[...] = (x_ref[...].astype(jnp.float32) - mean).astype(o_ref.dtype)


# ---------------------------------------------------------------------------
# Wrapper
# ---------------------------------------------------------------------------
def centered_layer(x, *, max_tile_rows=_MAX_TILE_ROWS):
    """Pallas TPU implementation of CenteredLayer.forward: x - x.mean()."""
    orig_shape = x.shape
    n = math.prod(orig_shape)
    dtype = x.dtype
    itemsize = jnp.dtype(dtype).itemsize
    inv_n = 1.0 / float(n)
    sublane = _sublane(dtype)
    flat = x.reshape(-1)

    # ---- Fused single-call path (input resident in VMEM) -------------------
    if n * 4 <= _FUSED_F32_BYTES:
        if n % _LANE == 0:
            x2d = flat.reshape(n // _LANE, _LANE)   # free contiguous reshape
        else:
            x2d = flat.reshape(1, n)                # whole-array block, small n
        out2d = pl.pallas_call(
            functools.partial(_fused_kernel, inv_n=inv_n),
            out_shape=jax.ShapeDtypeStruct(x2d.shape, dtype),
            compiler_params=pltpu.CompilerParams(vmem_limit_bytes=48 << 20),
        )(x2d)
        return out2d.reshape(orig_shape)

    # ---- Tiled two-pass path ------------------------------------------------
    use_pad = True
    tile_rows = None
    if n % _LANE == 0:
        rows = n // _LANE
        tile_rows = _pick_tile_rows(rows, sublane, max_tile_rows)
        if tile_rows is not None:
            use_pad = False

    if use_pad:
        # Fallback: zero-pad into a lane-dense slab.  Zero padding is
        # sum-neutral; the mean divides by the true element count n.
        rows = pl.cdiv(n, _LANE)
        tile_rows = min(max_tile_rows, pl.cdiv(rows, sublane) * sublane)
        rows_padded = pl.cdiv(rows, tile_rows) * tile_rows
        pad = rows_padded * _LANE - n
        x2d = jnp.pad(flat, (0, pad)).reshape(rows_padded, _LANE)
        rows = rows_padded
    else:
        pad = 0
        x2d = flat.reshape(rows, _LANE)             # no copy, no padding

    n_tiles = rows // tile_rows
    n_split = 2 if (n_tiles >= 2 and n_tiles % 2 == 0) else 1
    tiles_per_split = n_tiles // n_split

    # Pass 1: global partial sums.  Leading "parallel" axis shards the
    # reduction across both TensorCores on v7x; inner axis is the reduction.
    partials = pl.pallas_call(
        _sum_kernel,
        out_shape=jax.ShapeDtypeStruct((n_split, 8, _LANE), jnp.float32),
        grid=(n_split, tiles_per_split),
        in_specs=[pl.BlockSpec(
            (tile_rows, _LANE),
            lambda c, i: (c * tiles_per_split + i, 0))],
        out_specs=pl.BlockSpec((1, 8, _LANE), lambda c, i: (c, 0, 0)),
        compiler_params=pltpu.CompilerParams(
            dimension_semantics=("parallel", "arbitrary")),
        cost_estimate=pl.CostEstimate(
            flops=rows * _LANE,
            transcendentals=0,
            bytes_accessed=rows * _LANE * itemsize + n_split * 8 * _LANE * 4),
    )(x2d)

    # Pass 2: elementwise centering.  The tiny partial-sum block is resident
    # (constant index_map) and the mean is finished in-kernel -> no glue HLO.
    extra = {}
    if pad > 0:
        # x2d is an internally materialized copy -> safe to center in place.
        extra["input_output_aliases"] = {1: 0}
    out2d = pl.pallas_call(
        functools.partial(_center_kernel, inv_n=inv_n),
        out_shape=jax.ShapeDtypeStruct((rows, _LANE), dtype),
        grid=(n_tiles,),
        in_specs=[
            pl.BlockSpec((n_split, 8, _LANE), lambda i: (0, 0, 0)),
            pl.BlockSpec((tile_rows, _LANE), lambda i: (i, 0)),
        ],
        out_specs=pl.BlockSpec((tile_rows, _LANE), lambda i: (i, 0)),
        compiler_params=pltpu.CompilerParams(
            dimension_semantics=("parallel",)),
        cost_estimate=pl.CostEstimate(
            flops=rows * _LANE,
            transcendentals=0,
            bytes_accessed=2 * rows * _LANE * itemsize + n_split * 8 * _LANE * 4),
        **extra,
    )(partials, x2d)

    if pad > 0:
        return out2d.reshape(-1)[:n].reshape(orig_shape)
    return out2d.reshape(orig_shape)


if __name__ == "__main__":
    key = jax.random.PRNGKey(0)

    # Primary check: small input consistent with the module (fused path).
    x = jax.random.normal(key, (2, 4, 16, 16), dtype=jnp.float32)
    out = centered_layer(x)
    jax.block_until_ready(out)
    ref = x - jnp.mean(x)
    assert out.shape == x.shape
    assert jnp.allclose(out, ref, atol=1e-5, rtol=1e-5)
    assert abs(float(jnp.mean(out))) < 1e-4  # centered output has ~zero mean

    # Secondary check: exercises the no-copy tiled two-pass path (2-way split).
    xb = jax.random.normal(jax.random.PRNGKey(1), (4096, 1024), dtype=jnp.float32)
    outb = centered_layer(xb)
    jax.block_until_ready(outb)
    assert jnp.allclose(outb, xb - jnp.mean(xb), atol=1e-5, rtol=1e-5)

    # Secondary check: exercises the ragged padded fallback (+ in-place alias).
    xc = jax.random.normal(jax.random.PRNGKey(2), (2049, 1031), dtype=jnp.float32)
    outc = centered_layer(xc)
    jax.block_until_ready(outc)
    assert jnp.allclose(outc, xc - jnp.mean(xc), atol=1e-5, rtol=1e-5)

    print("KERNEL_OK")
</pallas_src>

<mosaic_0001>
module attributes {stable_mosaic.version = 11 : i64} {
  func.func @_fused_kernel(%arg0: memref<16x128xf32, #tpu.memory_space<vmem>>, %arg1: memref<16x128xf32, #tpu.memory_space<vmem>>) attributes {dimension_semantics = [], scalar_prefetch = 0 : i64, scratch_operands = 0 : i64, tpu.core_type = #tpu.core_type<tc>} {
    %c0 = arith.constant 0 : index
    %c0_0 = arith.constant 0 : index
    %0 = vector.load %arg0[%c0, %c0_0] : memref<16x128xf32, #tpu.memory_space<vmem>>, vector<16x128xf32>
    %1 = vector.shape_cast %0 : vector<16x128xf32> to vector<1x16x128xf32>
    %cst = arith.constant dense<0.000000e+00> : vector<1xf32>
    %2 = vector.multi_reduction <add>, %1, %cst [1, 2] : vector<1x16x128xf32> to vector<1xf32>
    %3 = vector.shape_cast %2 : vector<1xf32> to vector<1x1x1xf32>
    %4 = vector.extract %3[0, 0, 0] : f32 from vector<1x1x1xf32>
    %cst_1 = arith.constant 4.8828125E-4 : f32
    %5 = arith.mulf %4, %cst_1 : f32
    %6 = vector.broadcast %5 : f32 to vector<16x128xf32>
    %7 = arith.subf %0, %6 : vector<16x128xf32>
    %c0_2 = arith.constant 0 : index
    %c0_3 = arith.constant 0 : index
    %8 = vector.load %arg1[%c0_2, %c0_3] : memref<16x128xf32, #tpu.memory_space<vmem>>, vector<16x128xf32>
    tpu.vector_store %arg1[%c0_2, %c0_3], %7 {strides = array<i32>} : memref<16x128xf32, #tpu.memory_space<vmem>>, vector<16x128xf32>,
    return
  }
}

</mosaic_0001>

<llo_original>
// kernel: tpu_custom_call.1
$region0: #{tpu_custom_call.1}
  #allocation0 [shape = 'u32[]', space=smem, size = 0x4, offset = 0x4, fixed_abs, tag = 'smem constant byte address 0x4 - core index']
  #allocation1 [shape = 'u32[72,128]{1,0:T(1,128)}', space=vmem, size = 0x9000, scoped, tag = 'internal scratch']
  %s0 = inlined_call_operand.hbm [shape: f32[16,128], index: 0, kind: input, shape index: {}]
  %s1 = inlined_call_operand.hbm [shape: f32[16,128], index: 1, kind: output, shape index: {}]
  %s2 = sld [smem:[#allocation0]]
  $region18: #{tpu_custom_call.1} parent=0
    _
  %s4 = ssub.s32 1, %s2
  %s5 = scalar_select 0, %s4, %s2
  $region1: #{tpu_custom_call.1} parent=0
    #allocation2 [shape = 'u8[8192]{0}', space=vmem, size = 0x2000, scoped, tag = 'input window, operand 0, single buffered']
    #allocation3 [shape = 's32[1]{0}', space=sflag, size = 0x4, scoped, tag = 'scoped memory for tpu_custom_call.1']
    #allocation4 [shape = 's32[1]{0}', space=sflag, size = 0x4, scoped, tag = 'scoped memory for tpu_custom_call.1']
    #allocation5 [shape = 'u8[8192]{0}', space=vmem, size = 0x2000, scoped, tag = 'output window, operand 0, single buffered']
    %6 = vsyncpa [#allocation3], 0
    %7 = vsyncpa [#allocation4], 0
    // Predicated region
    $region2: #{tpu_custom_call.1} parent=1 // pred_check
      _
    $region3: #{tpu_custom_call.1} parent=1 // pred_check_branch
      %9 = sbr.rel (0) target = $region5
    $region4: #{tpu_custom_call.1} parent=1 // pred_region
      %11 = vsyncadd [#allocation3], 0
      %s12 = sshll.u32 %s0, 4
      %s13 = int_to_ptr.hbm [resolvable:$true] %s12
      %s14 = sshll.u32 [#allocation2], 4
      %s15 = int_to_ptr.vmem [resolvable:$true] %s14
      %20 = dma.hbm_to_vmem [thread:$0]  %s13, 256, %s15, [#allocation3], 128, 128, 8
    $region5: #{tpu_custom_call.1} parent=1 // pred_fallthru
      _
    // Predicated region
    $region6: #{tpu_custom_call.1} parent=1 // pred_check
      _
    $region7: #{tpu_custom_call.1} parent=1 // pred_check_branch
      %22 = sbr.rel (0) target = $region9
    $region8: #{tpu_custom_call.1} parent=1 // pred_region
      %24 = dma.done [#allocation3], 256
    $region9: #{tpu_custom_call.1} parent=1 // pred_fallthru
      _
    %v25 = vld [vmem:[#allocation2] sm:$0xff]
    %v26 = vld [vmem:[#allocation2 + $0x8] sm:$0xff]
    %v27 = vadd.f32 %v25, %v26
    %28 = vadd.xlane.f32.xlu0 %v27
    %v29 = vpop.xlane.xlu0 %28
    %v30 = vrot.slane %v29, 4
    %v31 = vadd.f32 %v29, %v30
    %v32 = vrot.slane %v31, 2
    %v33 = vadd.f32 %v31, %v32
    %v34 = vrot.slane %v33, 1
    %v35 = vadd.f32 %v33, %v34
    %s36 = vtos %v35
    %s37 = smul.f32 %s36, 0.00048828125
    %v38 = vstv %s37
    %v39 = vsub.f32 %v25, %v38
    %v40 = vsub.f32 %v26, %v38
    %41 = vst [vmem:[#allocation5] sm:$0xff] %v39
    %42 = vst [vmem:[#allocation5 + $0x8] sm:$0xff] %v40
    // Predicated region
    $region10: #{tpu_custom_call.1} parent=1 // pred_check
      _
    $region11: #{tpu_custom_call.1} parent=1 // pred_check_branch
      %44 = sbr.rel (0) target = $region13
    $region12: #{tpu_custom_call.1} parent=1 // pred_region
      %46 = vsyncadd [#allocation4], 0
      %s47 = sshll.u32 [#allocation5], 4
      %s48 = int_to_ptr.vmem [resolvable:$true] %s47
      %s49 = sshll.u32 %s1, 4
      %s50 = int_to_ptr.hbm [resolvable:$true] %s49
      %55 = dma.vmem_to_hbm [thread:$0]  %s48, 256, %s50, [#allocation4], 128, 128, 8
    $region13: #{tpu_custom_call.1} parent=1 // pred_fallthru
      _
    // Predicated region
    $region14: #{tpu_custom_call.1} parent=1 // pred_check
      _
    $region15: #{tpu_custom_call.1} parent=1 // pred_check_branch
      %57 = sbr.rel (0) target = $region17
    $region16: #{tpu_custom_call.1} parent=1 // pred_region
      %59 = dma.done [#allocation4], 256
    $region17: #{tpu_custom_call.1} parent=1 // pred_fallthru
      _
    %60 = vsyncpa [#allocation3], 1
    %61 = vsyncpa [#allocation4], 1

</llo_original>
